<compile_context>
chip_gen: v5e
topology: v5e:2x2
jax: 0.10.0
libtpu: 0.0.40
codegen_flags: <defaults>
</compile_context>

<pallas_src>
import functools

import jax
import jax.numpy as jnp
from jax.experimental import pallas as pl
from jax.experimental.pallas import tpu as pltpu

_LANES = 128
_SUBLANES = 8
_GROUP = _SUBLANES * _LANES          # 1024 elements per (8,128) vreg group
_CHUNK_GROUPS = 8                    # groups processed per inner-loop iteration
_FAST_PATH_ELEMENTS = 1 << 15        # below ~384 KiB of f32 inputs, XLA wins


def _round_up(x, m):
    return (x + m - 1) // m * m


def _smape_loss_ref(forecast, target, mask):
    """Pure-JAX reference mirroring the PyTorch module (also the small-input path)."""
    f = forecast.astype(jnp.float32)
    y = target.astype(jnp.float32)
    m = mask.astype(jnp.float32)
    num = jnp.abs(f - y)
    den = jnp.abs(f) + jnp.abs(y)
    ratio = num / den
    ratio = jnp.where(jnp.isnan(ratio) | (ratio == jnp.inf), 0.0, ratio)
    return 200.0 * jnp.mean(ratio * m)


def _make_smape_kernel(*, blk_groups, chunk_groups, n_steps, n_valid, needs_mask):
    """Builds the tile kernel with static tiling parameters baked in."""
    n_chunks = blk_groups // chunk_groups
    chunk_shape = (chunk_groups, _SUBLANES, _LANES)

    def kernel(f_ref, t_ref, m_ref, out_ref):
        c = pl.program_id(0)          # TensorCore split (parallel axis)
        s = pl.program_id(1)          # reduction steps (arbitrary axis)

        # Per-core resident accumulator block: init once per core.
        @pl.when(s == 0)
        def _():
            out_ref[...] = jnp.zeros_like(out_ref)

        if needs_mask:
            # Logical (unclamped) block index -> flat element offset of this tile.
            blk = c * n_steps + s
            tile_base = blk * (blk_groups * _GROUP)
            g = jax.lax.broadcasted_iota(jnp.int32, chunk_shape, 0)
            r = jax.lax.broadcasted_iota(jnp.int32, chunk_shape, 1)
            l = jax.lax.broadcasted_iota(jnp.int32, chunk_shape, 2)
            local_idx = g * _GROUP + r * _LANES + l   # hoisted out of the loop

        def body(i, acc):
            off = pl.multiple_of(i * chunk_groups, chunk_groups)
            f = f_ref[pl.ds(off, chunk_groups)].astype(jnp.float32)
            y = t_ref[pl.ds(off, chunk_groups)].astype(jnp.float32)
            m = m_ref[pl.ds(off, chunk_groups)].astype(jnp.float32)

            num = jnp.abs(f - y)
            den = jnp.abs(f) + jnp.abs(y)
            raw = num / den
            # divide_no_nan: den==0 ==> num==0 (0/0 -> NaN) -> 0; +inf -> 0
            # (torch reference only zeroes positive infinity).
            ratio = jnp.where((den == 0.0) | (raw == jnp.inf), 0.0, raw) * m

            if needs_mask:
                # Zero anything past the valid element count: covers the <1024
                # pad elements, the garbage rows of a partial last block, and
                # the whole clamped duplicate block of the 2-core split.
                flat = tile_base + off * _GROUP + local_idx
                ratio = jnp.where(flat < n_valid, ratio, 0.0)

            # Fold this chunk down to one (8,128) vreg: pure VPU adds,
            # no cross-lane reduce in the steady state.
            return acc + jnp.sum(ratio, axis=0)

        acc = jax.lax.fori_loop(
            0, n_chunks, body, jnp.zeros((_SUBLANES, _LANES), jnp.float32))
        out_ref[...] += acc

    return kernel


def smape_loss(insample, freq, forecast, target, mask, *,
               min_pallas_elements=_FAST_PATH_ELEMENTS,
               block_bytes=8 * 1024 * 1024,
               block_groups=None):
    """sMAPE loss. insample/freq kept for parity with the PyTorch module; unused."""
    del insample, freq  # not used by the sMAPE forward pass

    n = forecast.size
    if n < min_pallas_elements:
        # Fixed pallas_call overhead dominates for tiny eval shapes.
        return _smape_loss_ref(forecast, target, mask)

    # ---- lane-dense (G, 8, 128) view -------------------------------------
    n_pad = _round_up(n, _GROUP)
    g_total = n_pad // _GROUP

    def to_groups(x):
        v = x.reshape(-1)
        if n_pad != n:
            # At most _GROUP-1 trailing zeros; padded elems are masked anyway.
            v = jnp.pad(v, (0, n_pad - n))
        return v.reshape(g_total, _SUBLANES, _LANES)

    f_g, t_g, m_g = to_groups(forecast), to_groups(target), to_groups(mask)

    # ---- tile sizing ------------------------------------------------------
    itembytes = (jnp.dtype(forecast.dtype).itemsize
                 + jnp.dtype(target.dtype).itemsize
                 + jnp.dtype(mask.dtype).itemsize)
    if block_groups is None:
        blk_groups = min(g_total, max(1, block_bytes // (_GROUP * itembytes)))
    else:
        blk_groups = min(g_total, int(block_groups))
    chunk_groups = min(_CHUNK_GROUPS, blk_groups)
    blk_groups = max(chunk_groups, (blk_groups // chunk_groups) * chunk_groups)

    n_blocks = pl.cdiv(g_total, blk_groups)
    num_cores = 2 if n_blocks >= 2 else 1          # v7x: split rows across TCs
    n_steps = pl.cdiv(n_blocks, num_cores)
    needs_mask = (n_pad != n) or (g_total % blk_groups != 0) \
        or (n_blocks % num_cores != 0)

    def in_map(c, s):
        # Clamp so the DMA stays in bounds; the duplicated block is fully
        # zeroed by the in-kernel flat-index mask.
        return (jnp.minimum(c * n_steps + s, n_blocks - 1), 0, 0)

    in_spec = pl.BlockSpec((blk_groups, _SUBLANES, _LANES), in_map)
    out_spec = pl.BlockSpec((_SUBLANES, _LANES), lambda c, s: (c, 0))

    kernel = _make_smape_kernel(
        blk_groups=blk_groups, chunk_groups=chunk_groups, n_steps=n_steps,
        n_valid=n, needs_mask=needs_mask)

    partials = pl.pallas_call(
        kernel,
        out_shape=jax.ShapeDtypeStruct((num_cores * _SUBLANES, _LANES),
                                       jnp.float32),
        grid_spec=pltpu.PrefetchScalarGridSpec(
            num_scalar_prefetch=0,
            grid=(num_cores, n_steps),
            in_specs=[in_spec, in_spec, in_spec],
            out_specs=out_spec,
        ),
        compiler_params=pltpu.CompilerParams(
            # Core axis is parallel; the accumulation axis is a reduction.
            dimension_semantics=("parallel", "arbitrary"),
            # ~16 MiB of double-buffered inputs + tiny partials; 48 MiB is safe
            # on v5e/v6e (128 MiB physical) and v7x (64 MiB physical).
            vmem_limit_bytes=48 * 1024 * 1024,
        ),
    )(f_g, t_g, m_g)

    # Final cross-lane/core reduction of the tiny partial buffer + scaling.
    return 200.0 * jnp.sum(partials) / jnp.float32(n)


if __name__ == "__main__":
    key = jax.random.PRNGKey(0)

    def make_inputs(k, shape):
        _, k2, k3, k4 = jax.random.split(k, 4)
        fc = jax.random.normal(k2, shape, dtype=jnp.float32)
        tg = jax.random.normal(k3, shape, dtype=jnp.float32)
        mk = (jax.random.uniform(k4, shape) > 0.25).astype(jnp.float32)
        # Exercise the divide_no_nan (0/0) path.
        fc = fc.at[0, 0].set(0.0)
        tg = tg.at[0, 0].set(0.0)
        return fc, tg, mk

    cases = []
    key, sub = jax.random.split(key)
    # 1) Spec-sized tiny input -> pure-JAX fast path.
    cases.append(("tiny/fast-path", make_inputs(sub, (4, 16)), {}))
    key, sub = jax.random.split(key)
    # 2) Forced Pallas, multi-step grid, odd block count -> exercises the
    #    2-core split plus clamped/masked duplicate block.
    cases.append(("pallas/odd-blocks", make_inputs(sub, (40, 128)),
                  dict(min_pallas_elements=0, block_groups=1)))
    key, sub = jax.random.split(key)
    # 3) Forced Pallas, ragged element count -> pad + tail element masking.
    cases.append(("pallas/ragged", make_inputs(sub, (13, 96)),
                  dict(min_pallas_elements=0, block_groups=1)))
    key, sub = jax.random.split(key)
    # 4) Forced Pallas, default tile sizing, partial last block + ragged tail.
    cases.append(("pallas/partial-block", make_inputs(sub, (136, 96)),
                  dict(min_pallas_elements=0)))
    key, sub = jax.random.split(key)
    # 5) Forced Pallas, multi-chunk inner loop, single core, no masking path.
    cases.append(("pallas/multi-chunk", make_inputs(sub, (128, 128)),
                  dict(min_pallas_elements=0, block_groups=16)))

    Ti, freq = 32, 2
    for name, (fc, tg, mk), kwargs in cases:
        insample = jnp.zeros((fc.shape[0], Ti), jnp.float32)  # unused by sMAPE
        out = smape_loss(insample, freq, fc, tg, mk, **kwargs)
        out = jax.block_until_ready(out)
        ref = _smape_loss_ref(fc, tg, mk)
        assert jnp.allclose(out, ref, rtol=1e-5, atol=1e-6), (name, out, ref)

    print("KERNEL_OK")
</pallas_src>

<mosaic_0001>
module attributes {stable_mosaic.version = 11 : i64} {
  func.func @kernel(%arg0: i32, %arg1: i32, %arg2: memref<1x8x128xf32, #tpu.memory_space<vmem>>, %arg3: memref<1x8x128xf32, #tpu.memory_space<vmem>>, %arg4: memref<1x8x128xf32, #tpu.memory_space<vmem>>, %arg5: memref<8x128xf32, #tpu.memory_space<vmem>>) attributes {dimension_semantics = [#tpu.dimension_semantics<parallel>, #tpu.dimension_semantics<arbitrary>], iteration_bounds = array<i64: 2, 3>, scalar_prefetch = 0 : i64, scratch_operands = 0 : i64, tpu.core_type = #tpu.core_type<tc>, window_params = [{transform_indices = @transform_0, window_bounds = array<i64: 1, 8, 128>}, {transform_indices = @transform_1, window_bounds = array<i64: 1, 8, 128>}, {transform_indices = @transform_2, window_bounds = array<i64: 1, 8, 128>}, {transform_indices = @transform_3, window_bounds = array<i64: 8, 128>}]} {
    %c0_i32 = arith.constant 0 : i32
    %0 = arith.cmpi eq, %arg1, %c0_i32 : i32
    %1 = arith.extui %0 : i1 to i32
    %c0_i32_0 = arith.constant 0 : i32
    %2 = arith.cmpi ne, %1, %c0_i32_0 : i32
    scf.if %2 {
      %cst_19 = arith.constant 0.000000e+00 : f32
      %51 = vector.broadcast %cst_19 : f32 to vector<8x128xf32>
      %c0_20 = arith.constant 0 : index
      %c0_21 = arith.constant 0 : index
      %52 = vector.load %arg5[%c0_20, %c0_21] : memref<8x128xf32, #tpu.memory_space<vmem>>, vector<8x128xf32>
      tpu.vector_store %arg5[%c0_20, %c0_21], %51 {strides = array<i32>} : memref<8x128xf32, #tpu.memory_space<vmem>>, vector<8x128xf32>,
    } else {
    }
    %c3_i32 = arith.constant 3 : i32
    %3 = arith.muli %arg0, %c3_i32 : i32
    %4 = arith.addi %3, %arg1 : i32
    %c1024_i32 = arith.constant 1024 : i32
    %5 = arith.muli %4, %c1024_i32 : i32
    %6 = tpu.iota {dimensions = array<i32: 0>} : vector<1x8x128xi32>
    %7 = tpu.iota {dimensions = array<i32: 1>} : vector<1x8x128xi32>
    %8 = tpu.iota {dimensions = array<i32: 2>} : vector<1x8x128xi32>
    %c1024_i32_1 = arith.constant 1024 : i32
    %9 = vector.broadcast %c1024_i32_1 : i32 to vector<1x8x128xi32>
    %10 = arith.muli %6, %9 : vector<1x8x128xi32>
    %c128_i32 = arith.constant 128 : i32
    %11 = vector.broadcast %c128_i32 : i32 to vector<1x8x128xi32>
    %12 = arith.muli %7, %11 : vector<1x8x128xi32>
    %13 = arith.addi %10, %12 : vector<1x8x128xi32>
    %14 = arith.addi %13, %8 : vector<1x8x128xi32>
    %cst = arith.constant 0.000000e+00 : f32
    %15 = vector.broadcast %cst : f32 to vector<8x128xf32>
    %c0_i32_2 = arith.constant 0 : i32
    %c1_i32 = arith.constant 1 : i32
    %16 = arith.muli %c0_i32_2, %c1_i32 : i32
    %17 = tpu.assume_multiple %16, 1 : i32
    %18 = arith.index_cast %17 : i32 to index
    %c0 = arith.constant 0 : index
    %c0_3 = arith.constant 0 : index
    %19 = vector.load %arg2[%18, %c0, %c0_3] : memref<1x8x128xf32, #tpu.memory_space<vmem>>, vector<1x8x128xf32>
    %20 = arith.index_cast %17 : i32 to index
    %c0_4 = arith.constant 0 : index
    %c0_5 = arith.constant 0 : index
    %21 = vector.load %arg3[%20, %c0_4, %c0_5] : memref<1x8x128xf32, #tpu.memory_space<vmem>>, vector<1x8x128xf32>
    %22 = arith.index_cast %17 : i32 to index
    %c0_6 = arith.constant 0 : index
    %c0_7 = arith.constant 0 : index
    %23 = vector.load %arg4[%22, %c0_6, %c0_7] : memref<1x8x128xf32, #tpu.memory_space<vmem>>, vector<1x8x128xf32>
    %24 = arith.subf %19, %21 : vector<1x8x128xf32>
    %25 = math.absf %24 : vector<1x8x128xf32>
    %26 = math.absf %19 : vector<1x8x128xf32>
    %27 = math.absf %21 : vector<1x8x128xf32>
    %28 = arith.addf %26, %27 : vector<1x8x128xf32>
    %29 = arith.divf %25, %28 : vector<1x8x128xf32>
    %cst_8 = arith.constant 0.000000e+00 : f32
    %30 = vector.broadcast %cst_8 : f32 to vector<1x8x128xf32>
    %31 = arith.cmpf oeq, %28, %30 : vector<1x8x128xf32>
    %cst_9 = arith.constant 0x7F800000 : f32
    %32 = vector.broadcast %cst_9 : f32 to vector<1x8x128xf32>
    %33 = arith.cmpf oeq, %29, %32 : vector<1x8x128xf32>
    %34 = arith.ori %31, %33 : vector<1x8x128xi1>
    %cst_10 = arith.constant 0.000000e+00 : f32
    %35 = vector.broadcast %cst_10 : f32 to vector<1x8x128xf32>
    %36 = arith.select %34, %35, %29 : vector<1x8x128xi1>, vector<1x8x128xf32>
    %37 = arith.mulf %36, %23 : vector<1x8x128xf32>
    %c1024_i32_11 = arith.constant 1024 : i32
    %38 = arith.muli %17, %c1024_i32_11 : i32
    %39 = arith.addi %5, %38 : i32
    %40 = vector.broadcast %39 : i32 to vector<1x8x128xi32>
    %41 = arith.addi %40, %14 : vector<1x8x128xi32>
    %c5120_i32 = arith.constant 5120 : i32
    %42 = vector.broadcast %c5120_i32 : i32 to vector<1x8x128xi32>
    %43 = arith.cmpi slt, %41, %42 : vector<1x8x128xi32>
    %cst_12 = arith.constant 0.000000e+00 : f32
    %44 = vector.broadcast %cst_12 : f32 to vector<1x8x128xf32>
    %45 = arith.select %43, %37, %44 : vector<1x8x128xi1>, vector<1x8x128xf32>
    %cst_13 = arith.constant dense<0.000000e+00> : vector<8x128xf32>
    %46 = vector.multi_reduction <add>, %45, %cst_13 [0] : vector<1x8x128xf32> to vector<8x128xf32>
    %47 = arith.addf %15, %46 : vector<8x128xf32>
    %c1_i32_14 = arith.constant 1 : i32
    %c0_15 = arith.constant 0 : index
    %c0_16 = arith.constant 0 : index
    %48 = vector.load %arg5[%c0_15, %c0_16] : memref<8x128xf32, #tpu.memory_space<vmem>>, vector<8x128xf32>
    %49 = arith.addf %48, %47 : vector<8x128xf32>
    %c0_17 = arith.constant 0 : index
    %c0_18 = arith.constant 0 : index
    %50 = vector.load %arg5[%c0_17, %c0_18] : memref<8x128xf32, #tpu.memory_space<vmem>>, vector<8x128xf32>
    tpu.vector_store %arg5[%c0_17, %c0_18], %49 {strides = array<i32>} : memref<8x128xf32, #tpu.memory_space<vmem>>, vector<8x128xf32>,
    return
  }
  func.func @transform_0(%arg0: i32, %arg1: i32) -> (i32, i32, i32) {
    %c3_i32 = arith.constant 3 : i32
    %0 = arith.muli %arg0, %c3_i32 : i32
    %1 = arith.addi %0, %arg1 : i32
    %c4_i32 = arith.constant 4 : i32
    %2 = arith.minsi %1, %c4_i32 : i32
    %c0_i32 = arith.constant 0 : i32
    %c0_i32_0 = arith.constant 0 : i32
    %c0_i32_1 = arith.constant 0 : i32
    return %2, %c0_i32, %c0_i32_0 : i32, i32, i32
  }
  func.func @transform_1(%arg0: i32, %arg1: i32) -> (i32, i32, i32) {
    %c3_i32 = arith.constant 3 : i32
    %0 = arith.muli %arg0, %c3_i32 : i32
    %1 = arith.addi %0, %arg1 : i32
    %c4_i32 = arith.constant 4 : i32
    %2 = arith.minsi %1, %c4_i32 : i32
    %c0_i32 = arith.constant 0 : i32
    %c0_i32_0 = arith.constant 0 : i32
    %c0_i32_1 = arith.constant 0 : i32
    return %2, %c0_i32, %c0_i32_0 : i32, i32, i32
  }
  func.func @transform_2(%arg0: i32, %arg1: i32) -> (i32, i32, i32) {
    %c3_i32 = arith.constant 3 : i32
    %0 = arith.muli %arg0, %c3_i32 : i32
    %1 = arith.addi %0, %arg1 : i32
    %c4_i32 = arith.constant 4 : i32
    %2 = arith.minsi %1, %c4_i32 : i32
    %c0_i32 = arith.constant 0 : i32
    %c0_i32_0 = arith.constant 0 : i32
    %c0_i32_1 = arith.constant 0 : i32
    return %2, %c0_i32, %c0_i32_0 : i32, i32, i32
  }
  func.func @transform_3(%arg0: i32, %arg1: i32) -> (i32, i32) {
    %c0_i32 = arith.constant 0 : i32
    %c0_i32_0 = arith.constant 0 : i32
    return %arg0, %c0_i32 : i32, i32
  }
}

</mosaic_0001>

<llo_original>
// kernel: tpu_custom_call.1
$region0: #{tpu_custom_call.1}
  #allocation0 [shape = 'u32[]', space=smem, size = 0x4, offset = 0x4, fixed_abs, tag = 'smem constant byte address 0x4 - core index']
  #allocation1 [shape = 'u32[72,128]{1,0:T(1,128)}', space=vmem, size = 0x9000, scoped, tag = 'internal scratch']
  %s0 = inlined_call_operand.hbm [shape: f32[5,8,128], index: 0, kind: input, shape index: {}]
  %s1 = inlined_call_operand.hbm [shape: f32[5,8,128], index: 1, kind: input, shape index: {}]
  %s2 = inlined_call_operand.hbm [shape: f32[5,8,128], index: 2, kind: input, shape index: {}]
  %s3 = inlined_call_operand.hbm [shape: f32[16,128], index: 3, kind: output, shape index: {}]
  %s4 = sld [smem:[#allocation0]]
  $region61: #{tpu_custom_call.1} parent=0
    _
  %s6 = ssub.s32 1, %s4
  %s7 = scalar_select 0, %s6, %s4
  $region1: #{tpu_custom_call.1} parent=0
    #allocation2 [shape = 'u8[8192]{0}', space=vmem, size = 0x2000, scoped, tag = 'input window, operand 0']
    #allocation3 [shape = 's32[2]{0}', space=sflag, size = 0x8, scoped, tag = 'scoped memory for tpu_custom_call.1']
    #allocation4 [shape = 's32[2]{0}', space=sflag, size = 0x8, scoped, tag = 'scoped memory for tpu_custom_call.1']
    #allocation5 [shape = 'u8[8192]{0}', space=vmem, size = 0x2000, scoped, tag = 'input window, operand 1']
    #allocation6 [shape = 's32[2]{0}', space=sflag, size = 0x8, scoped, tag = 'scoped memory for tpu_custom_call.1']
    #allocation7 [shape = 'u8[8192]{0}', space=vmem, size = 0x2000, scoped, tag = 'input window, operand 2']
    #allocation8 [shape = 'u8[8192]{0}', space=vmem, size = 0x2000, scoped, tag = 'output window, operand 0']
    %8 = vsyncpa [#allocation3], 0
    %s9 = scalar_lea.sflag [#allocation3], 1
    %10 = vsyncpa %s9, 0
    %11 = vsyncpa [#allocation6], 0
    %s12 = scalar_lea.sflag [#allocation6], 1
    %13 = vsyncpa %s12, 0
    %14 = vsyncpa [#allocation4], 0
    %s15 = scalar_lea.sflag [#allocation4], 1
    %16 = vsyncpa %s15, 0
    loop: start=0, step=1, limit=8
    $region2: #{tpu_custom_call.1} parent=1 // loop_pre_header
      _
    $region3: #{tpu_custom_call.1} parent=1 // loop_header
      %s18 = sphi 0, %s22
      %p19 = scmp.ge.s32.totalorder %s18, 8
      %s25 = sphi 0, %s37
      %s26 = sphi 0, %s33
      %s27 = sphi 0, %s25
      %s28 = sphi 0, %s26
      %s29 = sphi 0, %s27
      %s30 = sphi 0, %s28
      %s48 = sphi 0, %s50
      %s51 = sphi 0, %s48
      %s52 = sphi 0, %s51
      %s68 = sphi 0, %s52
      %s82 = sphi 0, %s84
      %s85 = sphi 0, %s82
      %s86 = sphi 0, %s85
      %s102 = sphi 0, %s86
      %s116 = sphi 0, %s118
      %s119 = sphi 0, %s116
      %s120 = sphi 0, %s119
      %s136 = sphi 0, %s120
      %s142 = sphi 0, %s144
      %s145 = sphi 0, %s142
      %s146 = sphi 0, %s145
      %s162 = sphi 0, %s146
    $region4: #{tpu_custom_call.1} parent=1 // loop_header_branch
      %21 = sbr.rel (%p19) target = $region8
    $region5: #{tpu_custom_call.1} parent=1 // loop_body
      %s23 = ssub.s32 %s18, 1
      %s24 = ssub.s32 %s18, 2
      %s31 = sadd.s32 1, %s26
      %p32 = scmp.ge.s32.totalorder %s31, 3
      %s33 = scalar_select %p32, 0, %s31
      %s34 = sadd.s32 1, %s25
      %s35 = scalar_select %p32, %s34, %s25
      %p36 = scmp.ge.s32.totalorder %s35, 2
      %s37 = scalar_select %p36, 0, %s35
      %s38 = smul.u32 %s25, 3
      %s39 = sadd.s32 %s38, %s26
      %p40 = scmp.lt.s32.totalorder %s39, 4
      %s41 = scalar_select %p40, %s39, 4
      %s42 = smul.u32 %s37, 3
      %s43 = sadd.s32 %s42, %s33
      %p44 = scmp.lt.s32.totalorder %s43, 4
      %s45 = scalar_select %p44, %s43, 4
      %s46 = ssub.s32 %s41, %s45
      %p47 = scmp.eq.s32.totalorder %s46, 0
      %s49 = sadd.s32 %s48, 1
      %s50 = scalar_select %p47, %s48, %s49
      %p53 = pneg %p47
      %p54 = scmp.eq.s32.totalorder %s18, 5
      %p55 = por %p53, %p54
      %p56 = scmp.ne.s32.totalorder %s48, %s51
      %p57 = scmp.eq.s32.totalorder %s18, 0
      %p58 = por %p56, %p57
      %p59 = scmp.ne.s32.totalorder %s48, %s51
      %p60 = scmp.eq.s32.totalorder %s23, 5
      %p61 = por %p59, %p60
      %p62 = scmp.ne.s32.totalorder %s51, %s52
      %p63 = scmp.eq.s32.totalorder %s23, 0
      %p64 = por %p62, %p63
      %p65 = scmp.ne.s32.totalorder %s51, %s52
      %p66 = scmp.eq.s32.totalorder %s24, 5
      %p67 = por %p65, %p66
      %p69 = scmp.ne.s32.totalorder %s52, %s68
      %p70 = scmp.eq.s32.totalorder %s24, 0
      %p71 = por %p69, %p70
      %s72 = smul.u32 %s25, 3
      %s73 = sadd.s32 %s72, %s26
      %p74 = scmp.lt.s32.totalorder %s73, 4
      %s75 = scalar_select %p74, %s73, 4
      %s76 = smul.u32 %s37, 3
      %s77 = sadd.s32 %s76, %s33
      %p78 = scmp.lt.s32.totalorder %s77, 4
      %s79 = scalar_select %p78, %s77, 4
      %s80 = ssub.s32 %s75, %s79
      %p81 = scmp.eq.s32.totalorder %s80, 0
      %s83 = sadd.s32 %s82, 1
      %s84 = scalar_select %p81, %s82, %s83
      %p87 = pneg %p81
      %p88 = scmp.eq.s32.totalorder %s18, 5
      %p89 = por %p87, %p88
      %p90 = scmp.ne.s32.totalorder %s82, %s85
      %p91 = scmp.eq.s32.totalorder %s18, 0
      %p92 = por %p90, %p91
      %p93 = scmp.ne.s32.totalorder %s82, %s85
      %p94 = scmp.eq.s32.totalorder %s23, 5
      %p95 = por %p93, %p94
      %p96 = scmp.ne.s32.totalorder %s85, %s86
      %p97 = scmp.eq.s32.totalorder %s23, 0
      %p98 = por %p96, %p97
      %p99 = scmp.ne.s32.totalorder %s85, %s86
      %p100 = scmp.eq.s32.totalorder %s24, 5
      %p101 = por %p99, %p100
      %p103 = scmp.ne.s32.totalorder %s86, %s102
      %p104 = scmp.eq.s32.totalorder %s24, 0
      %p105 = por %p103, %p104
      %s106 = smul.u32 %s25, 3
      %s107 = sadd.s32 %s106, %s26
      %p108 = scmp.lt.s32.totalorder %s107, 4
      %s109 = scalar_select %p108, %s107, 4
      %s110 = smul.u32 %s37, 3
      %s111 = sadd.s32 %s110, %s33
      %p112 = scmp.lt.s32.totalorder %s111, 4
      %s113 = scalar_select %p112, %s111, 4
      %s114 = ssub.s32 %s109, %s113
      %p115 = scmp.eq.s32.totalorder %s114, 0
      %s117 = sadd.s32 %s116, 1
      %s118 = scalar_select %p115, %s116, %s117
      %p121 = pneg %p115
      %p122 = scmp.eq.s32.totalorder %s18, 5
      %p123 = por %p121, %p122
      %p124 = scmp.ne.s32.totalorder %s116, %s119
      %p125 = scmp.eq.s32.totalorder %s18, 0
      %p126 = por %p124, %p125
      %p127 = scmp.ne.s32.totalorder %s116, %s119
      %p128 = scmp.eq.s32.totalorder %s23, 5
      %p129 = por %p127, %p128
      %p130 = scmp.ne.s32.totalorder %s119, %s120
      %p131 = scmp.eq.s32.totalorder %s23, 0
      %p132 = por %p130, %p131
      %p133 = scmp.ne.s32.totalorder %s119, %s120
      %p134 = scmp.eq.s32.totalorder %s24, 5
      %p135 = por %p133, %p134
      %p137 = scmp.ne.s32.totalorder %s120, %s136
      %p138 = scmp.eq.s32.totalorder %s24, 0
      %p139 = por %p137, %p138
      %s140 = ssub.s32 %s25, %s37
      %p141 = scmp.eq.s32.totalorder %s140, 0
      %s143 = sadd.s32 %s142, 1
      %s144 = scalar_select %p141, %s142, %s143
      %p147 = pneg %p141
      %p148 = scmp.eq.s32.totalorder %s18, 5
      %p149 = por %p147, %p148
      %p150 = scmp.ne.s32.totalorder %s142, %s145
      %p151 = scmp.eq.s32.totalorder %s18, 0
      %p152 = por %p150, %p151
      %p153 = scmp.ne.s32.totalorder %s142, %s145
      %p154 = scmp.eq.s32.totalorder %s23, 5
      %p155 = por %p153, %p154
      %p156 = scmp.ne.s32.totalorder %s145, %s146
      %p157 = scmp.eq.s32.totalorder %s23, 0
      %p158 = por %p156, %p157
      %p159 = scmp.ne.s32.totalorder %s145, %s146
      %p160 = scmp.eq.s32.totalorder %s24, 5
      %p161 = por %p159, %p160
      %p163 = scmp.ne.s32.totalorder %s146, %s162
      %p164 = scmp.eq.s32.totalorder %s24, 0
      %p165 = por %p163, %p164
      %p166 = scmp.le.s32.totalorder 1, %s18
      %p167 = scmp.lt.s32.totalorder %s18, 7
      %p168 = pnand %p166, %p167
      %p169 = pneg %p168
      // Predicated region
      $region9: #{tpu_custom_call.1} parent=5 // pred_check
        _
      $region10: #{tpu_custom_call.1} parent=5 // pred_check_branch
        %171 = sbr.rel (%p168) target = $region12
      $region11: #{tpu_custom_call.1} parent=5 // pred_region
        %s172 = ssub.s32 %s18, 1
      $region12: #{tpu_custom_call.1} parent=5 // pred_fallthru
        _
      %p173 = scmp.lt.s32.totalorder %s18, 6
      // Predicated region
      $region13: #{tpu_custom_call.1} parent=5 // pred_check
        %p174 = pneg %p173
      $region14: #{tpu_custom_call.1} parent=5 // pred_check_branch
        %176 = sbr.rel (%p174) target = $region16
      $region15: #{tpu_custom_call.1} parent=5 // pred_region
        // Predicated region
        $region17: #{tpu_custom_call.1} parent=15 // pred_check
          %p177 = pneg %p58
        $region18: #{tpu_custom_call.1} parent=15 // pred_check_branch
          %179 = sbr.rel (%p177) target = $region20
        $region19: #{tpu_custom_call.1} parent=15 // pred_region
          %s180 = sand.u32 %s48, 1
          %s181 = scalar_lea.sflag [#allocation3], %s180
          %s182 = sand.u32 %s48, 1
          %s183 = smul.addr %s182, 8
          %s184 = scalar_lea.vmem [#allocation2], %s183
          %s185 = smul.u32 %s25, 3
          %s186 = sadd.s32 %s185, %s26
          %p187 = scmp.lt.s32.totalorder %s186, 4
          %s188 = scalar_select %p187, %s186, 4
          %190 = vsyncadd %s181, 0
          %s191 = smul.addr %s188, 8
          %s192 = scalar_lea.hbm %s0, %s191
          %s194 = sshll.u32 %s192, 4
          %s195 = int_to_ptr.hbm [resolvable:$true] %s194
          %s196 = sshll.u32 %s184, 4
          %s197 = int_to_ptr.vmem [resolvable:$true] %s196
          %199 = dma.hbm_to_vmem [thread:$0]  %s195, 128, %s197, %s181
        $region20: #{tpu_custom_call.1} parent=15 // pred_fallthru
          _
        // Predicated region
        $region21: #{tpu_custom_call.1} parent=15 // pred_check
          %p200 = pneg %p92
        $region22: #{tpu_custom_call.1} parent=15 // pred_check_branch
          %202 = sbr.rel (%p200) target = $region24
        $region23: #{tpu_custom_call.1} parent=15 // pred_region
          %s203 = sand.u32 %s18, 1
          %s204 = scalar_lea.sflag [#allocation6], %s203
          %s205 = sand.u32 %s82, 1
          %s206 = smul.addr %s205, 8
          %s207 = scalar_lea.vmem [#allocation5], %s206
          %s208 = smul.u32 %s25, 3
          %s209 = sadd.s32 %s208, %s26
          %p210 = scmp.lt.s32.totalorder %s209, 4
          %s211 = scalar_select %p210, %s209, 4
          %213 = vsyncadd %s204, 0
          %s214 = smul.addr %s211, 8
          %s215 = scalar_lea.hbm %s1, %s214
          %s217 = sshll.u32 %s215, 4
          %s218 = int_to_ptr.hbm [resolvable:$true] %s217
          %s219 = sshll.u32 %s207, 4
          %s220 = int_to_ptr.vmem [resolvable:$true] %s219
          %222 = dma.hbm_to_vmem [thread:$0]  %s218, 128, %s220, %s204
        $region24: #{tpu_custom_call.1} parent=15 // pred_fallthru
          _
        // Predicated region
        $region25: #{tpu_custom_call.1} parent=15 // pred_check
          %p223 = pneg %p126
        $region26: #{tpu_custom_call.1} parent=15 // pred_check_branch
          %225 = sbr.rel (%p223) target = $region28
        $region27: #{tpu_custom_call.1} parent=15 // pred_region
          %s226 = sand.u32 %s18, 1
          %s227 = scalar_lea.sflag [#allocation6], %s226
          %s228 = sand.u32 %s116, 1
          %s229 = smul.addr %s228, 8
          %s230 = scalar_lea.vmem [#allocation7], %s229
          %s231 = smul.u32 %s25, 3
          %s232 = sadd.s32 %s231, %s26
          %p233 = scmp.lt.s32.totalorder %s232, 4
          %s234 = scalar_select %p233, %s232, 4
          %236 = vsyncadd %s227, 0
          %s237 = smul.addr %s234, 8
          %s238 = scalar_lea.hbm %s2, %s237
          %s240 = sshll.u32 %s238, 4
          %s241 = int_to_ptr.hbm [resolvable:$true] %s240
          %s242 = sshll.u32 %s230, 4
          %s243 = int_to_ptr.vmem [resolvable:$true] %s242
          %245 = dma.hbm_to_vmem [thread:$0]  %s241, 128, %s243, %s227
        $region28: #{tpu_custom_call.1} parent=15 // pred_fallthru
          _
      $region16: #{tpu_custom_call.1} parent=5 // pred_fallthru
        _
      %p246 = scmp.le.s32.totalorder 1, %s18
      %p247 = scmp.lt.s32.totalorder %s18, 7
      %p248 = pnand %p246, %p247
      %p249 = pneg %p248
      // Predicated region
      $region29: #{tpu_custom_call.1} parent=5 // pred_check
        _
      $region30: #{tpu_custom_call.1} parent=5 // pred_check_branch
        %251 = sbr.rel (%p248) target = $region32
      $region31: #{tpu_custom_call.1} parent=5 // pred_region
        %s252 = ssub.s32 %s18, 1
        %s253 = sand.u32 %s51, 1
        %s254 = scalar_lea.sflag [#allocation3], %s253
        %s255 = sand.u32 %s51, 1
        %s256 = smul.addr %s255, 8
        %s257 = scalar_lea.vmem [#allocation2], %s256
        // Predicated region
        $region33: #{tpu_custom_call.1} parent=31 // pred_check
          %p258 = pneg %p64
        $region34: #{tpu_custom_call.1} parent=31 // pred_check_branch
          %260 = sbr.rel (%p258) target = $region36
        $region35: #{tpu_custom_call.1} parent=31 // pred_region
          %262 = dma.done %s254, 128
        $region36: #{tpu_custom_call.1} parent=31 // pred_fallthru
          _
        %s263 = sand.u32 %s23, 1
        %s264 = scalar_lea.sflag [#allocation6], %s263
        %s265 = sand.u32 %s85, 1
        %s266 = smul.addr %s265, 8
        %s267 = scalar_lea.vmem [#allocation5], %s266
        // Predicated region
        $region37: #{tpu_custom_call.1} parent=31 // pred_check
          %p268 = pneg %p98
        $region38: #{tpu_custom_call.1} parent=31 // pred_check_branch
          %270 = sbr.rel (%p268) target = $region40
        $region39: #{tpu_custom_call.1} parent=31 // pred_region
          %272 = dma.done %s264, 128
        $region40: #{tpu_custom_call.1} parent=31 // pred_fallthru
          _
        %s273 = sand.u32 %s23, 1
        %s274 = scalar_lea.sflag [#allocation6], %s273
        %s275 = sand.u32 %s119, 1
        %s276 = smul.addr %s275, 8
        %s277 = scalar_lea.vmem [#allocation7], %s276
        // Predicated region
        $region41: #{tpu_custom_call.1} parent=31 // pred_check
          %p278 = pneg %p132
        $region42: #{tpu_custom_call.1} parent=31 // pred_check_branch
          %280 = sbr.rel (%p278) target = $region44
        $region43: #{tpu_custom_call.1} parent=31 // pred_region
          %282 = dma.done %s274, 128
        $region44: #{tpu_custom_call.1} parent=31 // pred_fallthru
          _
        %s283 = sand.u32 %s51, 1
        %s284 = scalar_lea.sflag [#allocation3], %s283
        %s285 = sand.u32 %s51, 1
        %s286 = smul.addr %s285, 8
        %s287 = scalar_lea.vmem [#allocation2], %s286
        %p288 = pneg %p64
        %p289 = pneg %p61
        %s290 = sand.u32 %s23, 1
        %s291 = scalar_lea.sflag [#allocation6], %s290
        %s292 = sand.u32 %s85, 1
        %s293 = smul.addr %s292, 8
        %s294 = scalar_lea.vmem [#allocation5], %s293
        %p295 = pneg %p98
        %p296 = pneg %p95
        %s297 = sand.u32 %s23, 1
        %s298 = scalar_lea.sflag [#allocation6], %s297
        %s299 = sand.u32 %s119, 1
        %s300 = smul.addr %s299, 8
        %s301 = scalar_lea.vmem [#allocation7], %s300
        %p302 = pneg %p132
        %p303 = pneg %p129
        %p304 = pneg %p158
        %p305 = pneg %p155
        %s306 = sand.u32 %s145, 1
        %s307 = scalar_lea.sflag [#allocation4], %s306
        %s308 = sand.u32 %s145, 1
        %s309 = smul.addr %s308, 8
        %s310 = scalar_lea.vmem [#allocation8], %s309
        %s311 = smul.u32 %s27, 3
        %s312 = sadd.s32 %s311, %s28
        %p313 = scmp.lt.s32.totalorder %s312, 4
        %s314 = scalar_select %p313, %s312, 4
        %s315 = smul.u32 %s27, 3
        %s316 = sadd.s32 %s315, %s28
        %p317 = scmp.lt.s32.totalorder %s316, 4
        %s318 = scalar_select %p317, %s316, 4
        %s319 = smul.u32 %s27, 3
        %s320 = sadd.s32 %s319, %s28
        %p321 = scmp.lt.s32.totalorder %s320, 4
        %s322 = scalar_select %p321, %s320, 4
        %p323 = scmp.eq.s32.totalorder %s28, 0
        // Predicated region
        $region45: #{tpu_custom_call.1} parent=31 // pred_check
          %p324 = pneg %p323
        $region46: #{tpu_custom_call.1} parent=31 // pred_check_branch
          %326 = sbr.rel (%p324) target = $region48
        $region47: #{tpu_custom_call.1} parent=31 // pred_region
          %327 = vst [vmem:[%s310] sm:$0xff] 0.0
        $region48: #{tpu_custom_call.1} parent=31 // pred_fallthru
          _
        %s328 = smul.u32 %s27, 3
        %s329 = sadd.s32 %s328, %s28
        %s330 = smul.u32 %s329, 1024
        %v331 = vlaneseq
        %v332 = vshrl.u32 %v331, 7
        %v333 = vlaneseq
        %v334 = vand.u32 %v333, 127
        %v335 = vmul.u32 %v332, 128
        %v336 = vadd.s32 %v335, %v334
        %s337 = smul.u32 0, 8
        %s338 = scalar_lea.vmem %s257, %s337 [#allocation2]
        %v339 = vld [vmem:[%s338] sm:$0xff]
        %s340 = scalar_lea.vmem %s267, %s337 [#allocation5]
        %v341 = vld [vmem:[%s340] sm:$0xff]
        %s342 = scalar_lea.vmem %s277, %s337 [#allocation7]
        %v343 = vld [vmem:[%s342] sm:$0xff]
        %v344 = vsub.f32 %v339, %v341
        %v345 = vand.u32 2147483647, %v344
        %v346 = vand.u32 2147483647, %v339
        %v347 = vand.u32 2147483647, %v341
        %v348 = vadd.f32 %v346, %v347
        %v349 = vrcp.pop %v348
        %v350 = vmul.f32 %v348, %v349
        %v351 = vsub.f32 1.0, %v350
        %v352 = vmul.f32 %v349, %v351
        %v353 = vadd.f32 %v349, %v352
        %vm354 = vweird.f32 %v348
        %vm355 = vweird.f32 %v349
        %vm356 = vmor %vm354, %vm355
        %v357 = vsel %vm356, %v349, %v353
        %v358 = vand.u32 2147483647, %v348
        %vm359 = vcmp.eq.f32.partialorder %v358, 8.507059e+37
        %v360 = vand.u32 %v348, 2147483648
        %v361 = vor.u32 1.1754944e-38, %v360
        %v362 = vsel %vm359, %v361, %v357
        %v363 = vmul.f32 %v345, %v362
        %vm364 = vcmp.eq.f32.partialorder %v348, 0.0
        %vm365 = vcmp.eq.f32.partialorder %v363, inf
        %vm366 = vmor %vm364, %vm365
        %v367 = vsel %vm366, 0.0, %v363
        %v368 = vmul.f32 %v367, %v343
        %s369 = smul.u32 0, 1024
        %s370 = sadd.s32 %s330, %s369
        %v371 = vstv %s370
        %v372 = vadd.s32 %v371, %v336
        %vm373 = vcmp.lt.s32.totalorder %v372, 5120
        %v374 = vsel %vm373, %v368, 0.0
        %v375 = vadd.f32 %v374, 0.0
        %v376 = vadd.f32 %v375, 0.0
        %v377 = vld [vmem:[%s310] sm:$0xff]
        %v378 = vadd.f32 %v377, %v376
        %379 = vst [vmem:[%s310] sm:$0xff] %v378
        %s380 = sand.u32 %s145, 1
        %s381 = scalar_lea.sflag [#allocation4], %s380
        %s382 = sand.u32 %s145, 1
        %s383 = smul.addr %s382, 8
        %s384 = scalar_lea.vmem [#allocation8], %s383
        // Predicated region
        $region49: #{tpu_custom_call.1} parent=31 // pred_check
          %p385 = pneg %p155
        $region50: #{tpu_custom_call.1} parent=31 // pred_check_branch
          %387 = sbr.rel (%p385) target = $region52
        $region51: #{tpu_custom_call.1} parent=31 // pred_region
          %389 = vsyncadd %s381, 0
          %s390 = smul.addr %s27, 8
          %s391 = scalar_lea.hbm %s3, %s390
          %s393 = sshll.u32 %s384, 4
          %s394 = int_to_ptr.vmem [resolvable:$true] %s393
          %s395 = sshll.u32 %s391, 4
          %s396 = int_to_ptr.hbm [resolvable:$true] %s395
          %398 = dma.vmem_to_hbm [thread:$0]  %s394, 128, %s396, %s381
        $region52: #{tpu_custom_call.1} parent=31 // pred_fallthru
          _
      $region32: #{tpu_custom_call.1} parent=5 // pred_fallthru
        _
      %p399 = scmp.le.s32.totalorder 2, %s18
      // Predicated region
      $region53: #{tpu_custom_call.1} parent=5 // pred_check
        %p400 = pneg %p399
      $region54: #{tpu_custom_call.1} parent=5 // pred_check_branch
        %402 = sbr.rel (%p400) target = $region56
      $region55: #{tpu_custom_call.1} parent=5 // pred_region
        %s403 = ssub.s32 %s18, 2
        // Predicated region
        $region57: #{tpu_custom_call.1} parent=55 // pred_check
          %p404 = pneg %p161
        $region58: #{tpu_custom_call.1} parent=55 // pred_check_branch
          %406 = sbr.rel (%p404) target = $region60
        $region59: #{tpu_custom_call.1} parent=55 // pred_region
          %s407 = sand.u32 %s146, 1
          %s408 = scalar_lea.sflag [#allocation4], %s407
          %s409 = sand.u32 %s146, 1
          %s410 = smul.addr %s409, 8
          %s411 = scalar_lea.vmem [#allocation8], %s410
          %413 = dma.done %s408, 128
        $region60: #{tpu_custom_call.1} parent=55 // pred_fallthru
          _
      $region56: #{tpu_custom_call.1} parent=5 // pred_fallthru
        _
    $region6: #{tpu_custom_call.1} parent=1 // loop_footer
      %s22 = sadd.s32 1, %s18
    $region7: #{tpu_custom_call.1} parent=1 // loop_footer_branch
      %17 = sbr.rel target = $region3
    $region8: #{tpu_custom_call.1} parent=1 // loop_exit
      _
    %414 = vsyncpa [#allocation3], 1
    %s415 = scalar_lea.sflag [#allocation3], 1
    %416 = vsyncpa %s415, 1
    %417 = vsyncpa [#allocation6], 1
    %s418 = scalar_lea.sflag [#allocation6], 1
    %419 = vsyncpa %s418, 1
    %420 = vsyncpa [#allocation4], 1
    %s421 = scalar_lea.sflag [#allocation4], 1
    %422 = vsyncpa %s421, 1

</llo_original>
